<compile_context>
chip_gen: v6e
topology: v6e:2x2x1
jax: 0.10.0
libtpu: 0.0.40
codegen_flags: <defaults>
</compile_context>

<pallas_src>
import functools

import jax
import jax.numpy as jnp
from jax.experimental import pallas as pl
from jax.experimental.pallas import tpu as pltpu


MXU_DTYPE = jnp.bfloat16    # matmul operand dtype (f32 accumulation kept)
ACT_DTYPE = jnp.bfloat16    # inter-layer residual-stream dtype
_LN_EPS = 1e-5              # nn.LayerNorm default


def _round_up(x, m):
    return ((x + m - 1) // m) * m


def _vmem_limit_bytes():
    """Per-generation scoped-VMEM limit: ~half of physical, clamped to [32,100] MiB."""
    cap = 128 * 1024 * 1024
    try:
        info = pltpu.get_tpu_info()
        cap = int(getattr(info, "vmem_capacity_bytes", cap))
    except Exception:  # pragma: no cover - CPU / interpret fallback
        pass
    return int(min(100 * 1024 * 1024, max(32 * 1024 * 1024, cap // 2)))


_VMEM_LIMIT = _vmem_limit_bytes()


def _cparams(*sem):
    return pltpu.CompilerParams(dimension_semantics=tuple(sem),
                                vmem_limit_bytes=_VMEM_LIMIT)


def _gelu_tanh(x):
    # tanh-approximate GELU: tanh runs on the EUP slot (free when the kernel is
    # MXU/VALU bound), unlike the A&S erf polynomial (~12 VALU ops/elem).
    c = 0.7978845608028654  # sqrt(2/pi)
    return 0.5 * x * (1.0 + jnp.tanh(c * (x + 0.044715 * x * x * x)))


def _layernorm(x, gamma, beta):
    mean = jnp.mean(x, axis=-1, keepdims=True)
    var = jnp.mean((x - mean) ** 2, axis=-1, keepdims=True)
    return (x - mean) * jax.lax.rsqrt(var + _LN_EPS) * gamma + beta


# ----------------------------- Pallas kernels ------------------------------

def _linear_kernel(x_ref, w_ref, b_ref, o_ref):
    # y = x @ w + b      x:(TM,K)  w:(K,N) bf16  b:(1,N) f32
    y = jnp.dot(x_ref[...].astype(MXU_DTYPE), w_ref[...],
                preferred_element_type=jnp.float32)
    o_ref[...] = (y + b_ref[...]).astype(o_ref.dtype)


def pallas_linear(x, w_bf16, b, *, tm=1024, out_dtype=jnp.float32):
    """Row-tiled (parallel grid) linear layer; edge block masked by Pallas."""
    M, K = x.shape
    N = w_bf16.shape[1]
    tm = min(tm, _round_up(M, 8))
    return pl.pallas_call(
        _linear_kernel,
        out_shape=jax.ShapeDtypeStruct((M, N), out_dtype),
        grid=(pl.cdiv(M, tm),),
        in_specs=[pl.BlockSpec((tm, K), lambda i: (i, 0)),
                  pl.BlockSpec((K, N), lambda i: (0, 0)),
                  pl.BlockSpec((1, N), lambda i: (0, 0))],
        out_specs=pl.BlockSpec((tm, N), lambda i: (i, 0)),
        compiler_params=_cparams("parallel"),
    )(x, w_bf16, b.reshape(1, N))


def _layer_kernel(x_ref, g1_ref, b1_ref, wqkv_ref, wo_ref, bo_ref,
                  g2_ref, b2_ref, w1_ref, bf1_ref, w2_ref, bf2_ref,
                  o_ref, attn_scr, *, heads, dim_head, scale):
    """One full pre-norm transformer layer for one batch element.

    LN -> QKV -> per-head softmax attention -> out-proj -> +residual
       -> LN -> FF1 -> GELU(tanh) -> FF2 -> +residual.
    """
    x = x_ref[0].astype(jnp.float32)                       # (N, D)
    inner = heads * dim_head

    # ---------------- attention ----------------
    h = _layernorm(x, g1_ref[...], b1_ref[...])
    qkv = jnp.dot(h.astype(MXU_DTYPE), wqkv_ref[...],
                  preferred_element_type=jnp.float32)      # (N, 3*inner)

    # Per-head softmax attention; each head's output goes into the (N, inner)
    # bf16 VMEM scratch (bounds live ranges; one full-K out-proj matmul below).
    for hh in range(heads):                                # static offsets
        lo = hh * dim_head
        qh = qkv[:, lo:lo + dim_head] * scale              # scale folded into Q
        kh = qkv[:, inner + lo:inner + lo + dim_head]
        vh = qkv[:, 2 * inner + lo:2 * inner + lo + dim_head]
        s = jax.lax.dot_general(qh.astype(MXU_DTYPE), kh.astype(MXU_DTYPE),
                                (((1,), (1,)), ((), ())),
                                preferred_element_type=jnp.float32)   # (N, N)
        s = s - jnp.max(s, axis=-1, keepdims=True)
        p = jnp.exp(s)
        inv = pl.reciprocal(jnp.sum(p, axis=-1, keepdims=True), approx=True)
        oh = jnp.dot(p.astype(MXU_DTYPE), vh.astype(MXU_DTYPE),
                     preferred_element_type=jnp.float32) * inv
        attn_scr[:, lo:lo + dim_head] = oh.astype(attn_scr.dtype)

    # single full-K output projection (no `heads` skinny matmuls)
    attn_out = jnp.dot(attn_scr[...], wo_ref[...],
                       preferred_element_type=jnp.float32) + bo_ref[...]
    x = x + attn_out                                       # residual

    # ---------------- feed forward ----------------
    h2 = _layernorm(x, g2_ref[...], b2_ref[...])
    h1 = jnp.dot(h2.astype(MXU_DTYPE), w1_ref[...],
                 preferred_element_type=jnp.float32) + bf1_ref[...]
    h1 = _gelu_tanh(h1)
    ff = jnp.dot(h1.astype(MXU_DTYPE), w2_ref[...],
                 preferred_element_type=jnp.float32) + bf2_ref[...]
    o_ref[0] = (x + ff).astype(o_ref.dtype)


def pallas_transformer_layer(x, lyr, heads, dim_head):
    """Fused attention + FF transformer layer, one grid step per batch element."""
    B, N, D = x.shape
    inner = heads * dim_head
    mlp = lyr["w_ff1"].shape[1]
    kern = functools.partial(_layer_kernel, heads=heads, dim_head=dim_head,
                             scale=dim_head ** -0.5)
    return pl.pallas_call(
        kern,
        out_shape=jax.ShapeDtypeStruct((B, N, D), ACT_DTYPE),
        grid=(B,),
        in_specs=[
            pl.BlockSpec((1, N, D), lambda b: (b, 0, 0)),       # x (streamed)
            pl.BlockSpec((1, D), lambda b: (0, 0)),             # ln1 gamma
            pl.BlockSpec((1, D), lambda b: (0, 0)),             # ln1 beta
            pl.BlockSpec((D, 3 * inner), lambda b: (0, 0)),     # w_qkv (bf16)
            pl.BlockSpec((inner, D), lambda b: (0, 0)),         # w_out (bf16)
            pl.BlockSpec((1, D), lambda b: (0, 0)),             # b_out
            pl.BlockSpec((1, D), lambda b: (0, 0)),             # ln2 gamma
            pl.BlockSpec((1, D), lambda b: (0, 0)),             # ln2 beta
            pl.BlockSpec((D, mlp), lambda b: (0, 0)),           # w_ff1 (bf16)
            pl.BlockSpec((1, mlp), lambda b: (0, 0)),           # b_ff1
            pl.BlockSpec((mlp, D), lambda b: (0, 0)),           # w_ff2 (bf16)
            pl.BlockSpec((1, D), lambda b: (0, 0)),             # b_ff2
        ],
        out_specs=pl.BlockSpec((1, N, D), lambda b: (b, 0, 0)),
        scratch_shapes=[pltpu.VMEM((N, inner), MXU_DTYPE)],
        compiler_params=_cparams("parallel"),
    )(x,
      lyr["ln1_g"].reshape(1, D), lyr["ln1_b"].reshape(1, D),
      lyr["w_qkv"], lyr["w_out"], lyr["b_out"].reshape(1, D),
      lyr["ln2_g"].reshape(1, D), lyr["ln2_b"].reshape(1, D),
      lyr["w_ff1"], lyr["b_ff1"].reshape(1, mlp),
      lyr["w_ff2"], lyr["b_ff2"].reshape(1, D))


def _mse_kernel(p_ref, t_ref, o_ref, acc_ref, *, denom):
    i = pl.program_id(0)

    @pl.when(i == 0)
    def _():
        acc_ref[...] = jnp.zeros_like(acc_ref)

    d = p_ref[...].astype(jnp.float32) - t_ref[...].astype(jnp.float32)
    tm, k = d.shape
    # fold (tm, K) into the resident (8, K) accumulator with pure VPU adds
    acc_ref[...] += jnp.sum((d * d).reshape(tm // 8, 8, k), axis=0)

    @pl.when(i == pl.num_programs(0) - 1)
    def _():
        o_ref[...] = jnp.sum(acc_ref[...], keepdims=True) / denom


def pallas_mse(pred, target, *, tm=512):
    M, K = pred.shape
    tm = min(tm, _round_up(M, 8))
    Mp = _round_up(M, tm)
    if Mp != M:
        # explicit zero-pad only here: garbage edge rows would corrupt the sum
        pred = jnp.pad(pred, ((0, Mp - M), (0, 0)))
        target = jnp.pad(target, ((0, Mp - M), (0, 0)))
    out = pl.pallas_call(
        functools.partial(_mse_kernel, denom=float(M * K)),
        out_shape=jax.ShapeDtypeStruct((1, 1), jnp.float32),
        grid=(Mp // tm,),
        in_specs=[pl.BlockSpec((tm, K), lambda i: (i, 0)),
                  pl.BlockSpec((tm, K), lambda i: (i, 0))],
        out_specs=pl.BlockSpec((1, 1), lambda i: (0, 0)),
        scratch_shapes=[pltpu.VMEM((8, K), jnp.float32)],
        compiler_params=_cparams("arbitrary"),
    )(pred, target)
    return out[0, 0]


# ------------------------- vit_pytorch Transformer --------------------------

def transformer_forward(x, layers, heads, dim_head):
    """Pre-norm Transformer; each layer is ONE fused per-batch Pallas kernel."""
    x = x.astype(ACT_DTYPE)
    for lyr in layers:
        x = pallas_transformer_layer(x, lyr, heads, dim_head)
    return x


# ------------------------------ MAE forward ---------------------------------

def mae_forward(params, img, mask_key, *, patch_size, masking_ratio,
                enc_heads, enc_dim_head, dec_heads, dec_dim_head):
    B, C, H, W = img.shape
    p = patch_size

    # to_patch: Rearrange('b c (h p1) (w p2) -> b (h w) (p1 p2 c)')
    x = img.reshape(B, C, H // p, p, W // p, p)
    patches = x.transpose(0, 2, 4, 3, 5, 1).reshape(
        B, (H // p) * (W // p), p * p * C)
    num_patches, patch_dim = patches.shape[1], patches.shape[2]

    # patch_to_emb (Linear) + positional embedding
    enc_dim = params["patch_w"].shape[1]
    tokens = pallas_linear(patches.reshape(B * num_patches, patch_dim),
                           params["patch_w"], params["patch_b"])
    tokens = tokens.reshape(B, num_patches, enc_dim)
    tokens = tokens + params["pos_embedding"][:, 1:num_patches + 1]

    # random masking (plain-JAX glue: argsort + gathers)
    num_masked = int(masking_ratio * num_patches)
    rand = jax.random.uniform(mask_key, (B, num_patches))
    rand_indices = jnp.argsort(rand, axis=-1)
    masked_indices = rand_indices[:, :num_masked]
    unmasked_indices = rand_indices[:, num_masked:]

    tokens = jnp.take_along_axis(tokens, unmasked_indices[:, :, None], axis=1)
    masked_patches = jnp.take_along_axis(patches, masked_indices[:, :, None], axis=1)

    # encode only unmasked tokens (bf16 residual stream between layers)
    encoder_tokens = transformer_forward(
        tokens, params["enc_layers"], enc_heads, enc_dim_head)

    # project encoder dim -> decoder dim
    n_unmasked = encoder_tokens.shape[1]
    dec_dim = params["enc_to_dec_w"].shape[1]
    decoder_tokens = pallas_linear(
        encoder_tokens.reshape(B * n_unmasked, enc_dim),
        params["enc_to_dec_w"], params["enc_to_dec_b"],
        out_dtype=ACT_DTYPE).reshape(B, n_unmasked, dec_dim)

    # mask tokens + decoder positional embedding (gather)
    mask_tokens = params["mask_token"][None, None, :] + \
        params["decoder_pos_emb"][masked_indices]                  # (B, n_mask, dec_dim)

    decoder_input = jnp.concatenate(
        [mask_tokens.astype(ACT_DTYPE), decoder_tokens], axis=1)
    decoded = transformer_forward(
        decoder_input, params["dec_layers"], dec_heads, dec_dim_head)

    # reconstruct masked patches and compute MSE loss (f32)
    mask_decoded = decoded[:, :num_masked]
    pre_pixel_values = pallas_linear(
        mask_decoded.reshape(B * num_masked, dec_dim),
        params["to_pixels_w"], params["to_pixels_b"])               # (B*n_mask, patch_dim)
    recon_loss = pallas_mse(
        pre_pixel_values, masked_patches.reshape(B * num_masked, patch_dim))
    return recon_loss


# ------------------------------ parameter init ------------------------------

def _dense(key, din, dout, scale=0.02):
    # matmul weights live in HBM pre-cast to the MXU dtype (bf16); biases stay f32
    w = (scale * jax.random.normal(key, (din, dout), jnp.float32)).astype(MXU_DTYPE)
    b = jnp.zeros((dout,), jnp.float32)
    return w, b


def init_transformer(key, depth, dim, heads, dim_head, mlp_dim):
    inner = heads * dim_head
    layers = []
    for i in range(depth):
        keys = jax.random.split(jax.random.fold_in(key, i), 4)
        w_qkv, _ = _dense(keys[0], dim, 3 * inner)        # to_qkv has no bias
        w_out, b_out = _dense(keys[1], inner, dim)
        w_ff1, b_ff1 = _dense(keys[2], dim, mlp_dim)
        w_ff2, b_ff2 = _dense(keys[3], mlp_dim, dim)
        layers.append(dict(
            ln1_g=jnp.ones((dim,), jnp.float32), ln1_b=jnp.zeros((dim,), jnp.float32),
            w_qkv=w_qkv, w_out=w_out, b_out=b_out,
            ln2_g=jnp.ones((dim,), jnp.float32), ln2_b=jnp.zeros((dim,), jnp.float32),
            w_ff1=w_ff1, b_ff1=b_ff1, w_ff2=w_ff2, b_ff2=b_ff2,
        ))
    return layers


if __name__ == "__main__":
    # small, shape-consistent config
    B, C, H, W = 2, 4, 16, 16
    patch_size = 4
    num_patches = (H // patch_size) * (W // patch_size)            # 16
    patch_dim = C * patch_size * patch_size                        # 64

    enc_dim, enc_depth, enc_heads, enc_dim_head, enc_mlp = 32, 2, 4, 16, 64
    dec_dim, dec_depth, dec_heads, dec_dim_head = 16, 1, 4, 16
    dec_mlp = dec_dim * 4
    masking_ratio = 0.75

    root = jax.random.PRNGKey(0)
    (k_img, k_mask, k_pos, k_patch, k_enc, k_e2d,
     k_msk, k_dpe, k_dec, k_pix) = jax.random.split(root, 10)

    patch_w, patch_b = _dense(k_patch, patch_dim, enc_dim)
    e2d_w, e2d_b = _dense(k_e2d, enc_dim, dec_dim)
    pix_w, pix_b = _dense(k_pix, dec_dim, patch_dim)

    params = {
        "pos_embedding": 0.02 * jax.random.normal(
            k_pos, (1, num_patches + 1, enc_dim), jnp.float32),
        "patch_w": patch_w, "patch_b": patch_b,
        "enc_layers": init_transformer(k_enc, enc_depth, enc_dim,
                                       enc_heads, enc_dim_head, enc_mlp),
        "enc_to_dec_w": e2d_w, "enc_to_dec_b": e2d_b,
        "mask_token": 0.02 * jax.random.normal(k_msk, (dec_dim,), jnp.float32),
        "decoder_pos_emb": 0.02 * jax.random.normal(
            k_dpe, (num_patches, dec_dim), jnp.float32),
        "dec_layers": init_transformer(k_dec, dec_depth, dec_dim,
                                       dec_heads, dec_dim_head, dec_mlp),
        "to_pixels_w": pix_w, "to_pixels_b": pix_b,
    }

    img = jax.random.normal(k_img, (B, C, H, W), jnp.float32)

    loss = mae_forward(params, img, k_mask,
                       patch_size=patch_size, masking_ratio=masking_ratio,
                       enc_heads=enc_heads, enc_dim_head=enc_dim_head,
                       dec_heads=dec_heads, dec_dim_head=dec_dim_head)
    loss = jax.block_until_ready(loss)
    assert loss.shape == () and bool(jnp.isfinite(loss))
    print("KERNEL_OK")
</pallas_src>

<mosaic_0001>
module attributes {stable_mosaic.version = 11 : i64} {
  func.func @_linear_kernel(%arg0: i32, %arg1: memref<32x64xf32, #tpu.memory_space<vmem>>, %arg2: memref<64x32xbf16, #tpu.memory_space<vmem>>, %arg3: memref<1x32xf32, #tpu.memory_space<vmem>>, %arg4: memref<32x32xf32, #tpu.memory_space<vmem>>) attributes {dimension_semantics = [#tpu.dimension_semantics<parallel>], iteration_bounds = array<i64: 1>, scalar_prefetch = 0 : i64, scratch_operands = 0 : i64, tpu.core_type = #tpu.core_type<tc>, window_params = [{transform_indices = @transform_0, window_bounds = array<i64: 32, 64>}, {pipeline_mode = #tpu.pipeline_mode<synchronous>, transform_indices = @transform_1, window_bounds = array<i64: 64, 32>}, {pipeline_mode = #tpu.pipeline_mode<synchronous>, transform_indices = @transform_2, window_bounds = array<i64: 1, 32>}, {transform_indices = @transform_3, window_bounds = array<i64: 32, 32>}]} {
    %c0 = arith.constant 0 : index
    %c0_0 = arith.constant 0 : index
    %0 = vector.load %arg1[%c0, %c0_0] : memref<32x64xf32, #tpu.memory_space<vmem>>, vector<32x64xf32>
    %1 = arith.truncf %0 : vector<32x64xf32> to vector<32x64xbf16>
    %c0_1 = arith.constant 0 : index
    %c0_2 = arith.constant 0 : index
    %2 = vector.load %arg2[%c0_1, %c0_2] : memref<64x32xbf16, #tpu.memory_space<vmem>>, vector<64x32xbf16>
    %cst = arith.constant dense<0.000000e+00> : vector<32x32xf32>
    %3 = tpu.matmul %1, %2, %cst {dimension_numbers = #tpu.dot_dimension_numbers<[1], [0], [0], [1], [0, 0, 1, 1], [], []>} : vector<32x64xbf16>, vector<64x32xbf16>, vector<32x32xf32> -> vector<32x32xf32>
    %c0_3 = arith.constant 0 : index
    %c0_4 = arith.constant 0 : index
    %4 = vector.load %arg3[%c0_3, %c0_4] : memref<1x32xf32, #tpu.memory_space<vmem>>, vector<1x32xf32>
    %5 = vector.broadcast %4 : vector<1x32xf32> to vector<32x32xf32>
    %6 = arith.addf %3, %5 : vector<32x32xf32>
    %c0_5 = arith.constant 0 : index
    %c0_6 = arith.constant 0 : index
    %7 = vector.load %arg4[%c0_5, %c0_6] : memref<32x32xf32, #tpu.memory_space<vmem>>, vector<32x32xf32>
    tpu.vector_store %arg4[%c0_5, %c0_6], %6 {strides = array<i32>} : memref<32x32xf32, #tpu.memory_space<vmem>>, vector<32x32xf32>,
    return
  }
  func.func @transform_0(%arg0: i32) -> (i32, i32) {
    %c0_i32 = arith.constant 0 : i32
    %c0_i32_0 = arith.constant 0 : i32
    return %arg0, %c0_i32 : i32, i32
  }
  func.func @transform_1(%arg0: i32) -> (i32, i32) {
    %c0_i32 = arith.constant 0 : i32
    %c0_i32_0 = arith.constant 0 : i32
    %c0_i32_1 = arith.constant 0 : i32
    return %c0_i32, %c0_i32_0 : i32, i32
  }
  func.func @transform_2(%arg0: i32) -> (i32, i32) {
    %c0_i32 = arith.constant 0 : i32
    %c0_i32_0 = arith.constant 0 : i32
    %c0_i32_1 = arith.constant 0 : i32
    return %c0_i32, %c0_i32_0 : i32, i32
  }
  func.func @transform_3(%arg0: i32) -> (i32, i32) {
    %c0_i32 = arith.constant 0 : i32
    %c0_i32_0 = arith.constant 0 : i32
    return %arg0, %c0_i32 : i32, i32
  }
}

</mosaic_0001>

<llo_original>
// kernel: tpu_custom_call.1
$region0: #{tpu_custom_call.1}
  #allocation0 [shape = 'u32[]', space=smem, size = 0x4, offset = 0x4, fixed_abs, tag = 'smem constant byte address 0x4 - core index']
  #allocation1 [shape = 'u32[144,128]{1,0:T(1,128)}', space=vmem, size = 0x12000, scoped, tag = 'internal scratch']
  %s0 = inlined_call_operand.vmem [shape: f32[32,64], index: 0, kind: input, shape index: {}]
  %s1 = inlined_call_operand.vmem [shape: bf16[64,32], index: 1, kind: input, shape index: {}]
  %s2 = inlined_call_operand.vmem [shape: f32[1,32], index: 2, kind: input, shape index: {}]
  %s3 = inlined_call_operand.hbm [shape: f32[32,32], index: 3, kind: output, shape index: {}]
  %s4 = sld [smem:[#allocation0]]
  $region22: #{tpu_custom_call.1} parent=0
    _
  %s6 = ssub.s32 1, %s4
  %s7 = scalar_select 0, %s6, %s4
  $region1: #{tpu_custom_call.1} parent=0
    #allocation2 [shape = 'u8[16384]{0}', space=vmem, size = 0x4000, scoped, tag = 'output window, operand 0, single buffered']
    #allocation3 [shape = 's32[1]{0}', space=sflag, size = 0x4, scoped, tag = 'scoped memory for tpu_custom_call.1']
    %8 = vsyncpa [#allocation3], 0
    // Predicated region
    $region2: #{tpu_custom_call.1} parent=1 // pred_check
      _
    $region3: #{tpu_custom_call.1} parent=1 // pred_check_branch
      %10 = sbr.rel (0) target = $region5
    $region4: #{tpu_custom_call.1} parent=1 // pred_region
      _
    $region5: #{tpu_custom_call.1} parent=1 // pred_fallthru
      _
    // Predicated region
    $region6: #{tpu_custom_call.1} parent=1 // pred_check
      _
    $region7: #{tpu_custom_call.1} parent=1 // pred_check_branch
      %12 = sbr.rel (0) target = $region9
    $region8: #{tpu_custom_call.1} parent=1 // pred_region
      _
    $region9: #{tpu_custom_call.1} parent=1 // pred_fallthru
      _
    // Predicated region
    $region10: #{tpu_custom_call.1} parent=1 // pred_check
      _
    $region11: #{tpu_custom_call.1} parent=1 // pred_check_branch
      %14 = sbr.rel (0) target = $region13
    $region12: #{tpu_custom_call.1} parent=1 // pred_region
      _
    $region13: #{tpu_custom_call.1} parent=1 // pred_fallthru
      _
    %v16 = vld [vmem:[%s0] sm:$0xff]
    %v17 = vld [vmem:[%s0 + $0x8] sm:$0xff]
    %v18 = vld [vmem:[%s0 + $0x10] sm:$0xff]
    %v19 = vld [vmem:[%s0 + $0x18] sm:$0xff]
    %v20 = vpack.c.bf16 %v17, %v16
    %v21 = vpack.c.bf16 %v19, %v18
    %v22 = vld [vmem:[%s1] sm:$0xf]
    %v23 = vld [vmem:[%s1 + $0x4] sm:$0xf]
    %v24 = vld [vmem:[%s1 + $0x8] sm:$0xf]
    %v25 = vld [vmem:[%s1 + $0xc] sm:$0xf]
    %v26 = vld [vmem:[%s1 + $0x10] sm:$0xf]
    %v27 = vld [vmem:[%s1 + $0x14] sm:$0xf]
    %v28 = vld [vmem:[%s1 + $0x18] sm:$0xf]
    %v29 = vld [vmem:[%s1 + $0x1c] sm:$0xf]
    %v30 = vld [vmem:[%s2] sm:$0x1]
    %v32 = vlaneseq
    %v33 = vshrl.u32 %v32, 7
    %v34 = vsub.s32 0, %v33
    %v35 = vrot.slane %v30, %v34
    %v45 = vunpack.c.l.b16 %v22
    %v46 = vunpack.c.l.b16 %v23
    %v47 = vunpack.c.l.b16 %v24
    %v48 = vunpack.c.l.b16 %v25
    %v49 = vunpack.c.l.b16 %v26
    %v50 = vunpack.c.l.b16 %v27
    %v51 = vunpack.c.l.b16 %v28
    %v52 = vunpack.c.l.b16 %v29
    %v53 = vpack.c.b16 %v46, %v45
    %v54 = vpack.c.b16 %v48, %v47
    %v55 = vpack.c.b16 %v50, %v49
    %v56 = vpack.c.b16 %v52, %v51
    %vm61 = vcmask 523264
    %v63 = vsel %vm61, %v20, 0
    %v66 = vsel %vm61, %v21, 0
    %68 = vmatprep.subr.bf16.mxu0 0
    %69 = vmatpush1.bf16.msra.mxu0 0
    %70 = vmatprep.subr.bf16.mxu0 0
    %71 = vmatpush1.bf16.msra.mxu0 0
    %72 = vmatprep.subr.bf16.mxu0 0
    %73 = vmatpush1.bf16.msra.mxu0 0
    %74 = vmatprep.subr.bf16.mxu0 0
    %75 = vmatpush1.bf16.msra.mxu0 0
    %76 = vmatprep.subr.bf16.mxu0 0
    %77 = vmatpush1.bf16.msra.mxu0 %v56
    %78 = vmatprep.subr.bf16.mxu0 0
    %79 = vmatpush1.bf16.msra.mxu0 %v55
    %80 = vmatprep.subr.bf16.mxu0 0
    %81 = vmatpush1.bf16.msra.mxu0 %v54
    %82 = vmatprep.subr.bf16.mxu0 0
    %83 = vmatpush1.bf16.msra.mxu0 %v53
    %84 = vmatprep.subr.bf16.mxu0 0
    %85 = vmatpush2.bf16.msra.mxu0 0
    %86 = vmatprep.subr.bf16.mxu0 0
    %87 = vmatpush2.bf16.msra.mxu0 0
    %88 = vmatprep.subr.bf16.mxu0 0
    %89 = vmatpush2.bf16.msra.mxu0 0
    %90 = vmatprep.subr.bf16.mxu0 0
    %91 = vmatpush2.bf16.msra.mxu0 0
    %92 = vmatprep.subr.bf16.mxu0 0
    %93 = vmatpush2.bf16.msra.mxu0 0
    %94 = vmatprep.subr.bf16.mxu0 0
    %95 = vmatpush2.bf16.msra.mxu0 0
    %96 = vmatprep.subr.bf16.mxu0 0
    %97 = vmatpush2.bf16.msra.mxu0 0
    %98 = vmatprep.subr.bf16.mxu0 0
    %99 = vmatpush2.bf16.msra.mxu0 0
    %100 = vmatprep.mubr.bf16.mxu0 0
    %101 = vmatmul.mubr.bf16.gmra.mxu0 %v63
    %v102 = vpop.f32.mrf.mxu0
    %v103 = vadd.f32 %v35, %v102
    %v104 = vpop.f32.mrf.mxu0
    %v105 = vpop.f32.mrf.mxu0
    %v106 = vadd.f32 %v35, %v105
    %v107 = vpop.f32.mrf.mxu0
    %108 = vmatprep.mubr.bf16.mxu0 0
    %109 = vmatmul.mubr.bf16.gmra.mxu0 %v66
    %v110 = vpop.f32.mrf.mxu0
    %v111 = vadd.f32 %v35, %v110
    %v112 = vpop.f32.mrf.mxu0
    %v113 = vpop.f32.mrf.mxu0
    %v114 = vadd.f32 %v35, %v113
    %v115 = vpop.f32.mrf.mxu0
    %116 = vdwg.mxu0
    %vm117 = vcmask 261120
    %118 = vst.msk [vmem:[#allocation2] sm:$0xff] %vm117, %v103
    %119 = vst.msk [vmem:[#allocation2 + $0x8] sm:$0xff] %vm117, %v106
    %120 = vst.msk [vmem:[#allocation2 + $0x10] sm:$0xff] %vm117, %v111
    %121 = vst.msk [vmem:[#allocation2 + $0x18] sm:$0xff] %vm117, %v114
    // Predicated region
    $region14: #{tpu_custom_call.1} parent=1 // pred_check
      _
    $region15: #{tpu_custom_call.1} parent=1 // pred_check_branch
      %123 = sbr.rel (0) target = $region17
    $region16: #{tpu_custom_call.1} parent=1 // pred_region
      %s125 = ssub.s32 512, 512
      %126 = vsyncadd [#allocation3], %s125
      %s127 = sshll.u32 [#allocation2], 4
      %s128 = int_to_ptr.vmem [resolvable:$true] %s127
      %133 = dma.vmem_to_hbm [thread:$0]  %s128, 512, %s3, [#allocation3], 128, 128, 8
    $region17: #{tpu_custom_call.1} parent=1 // pred_fallthru
      _
    // Predicated region
    $region18: #{tpu_custom_call.1} parent=1 // pred_check
      _
    $region19: #{tpu_custom_call.1} parent=1 // pred_check_branch
      %135 = sbr.rel (0) target = $region21
    $region20: #{tpu_custom_call.1} parent=1 // pred_region
      %136 = dma.done [#allocation3], 512
    $region21: #{tpu_custom_call.1} parent=1 // pred_fallthru
      _
    %137 = vsyncpa [#allocation3], 1

</llo_original>
